<compile_context>
chip_gen: v6e
topology: v6e:2x2x1
jax: 0.10.0
libtpu: 0.0.40
codegen_flags: <defaults>
</compile_context>

<pallas_src>
import jax
import jax.numpy as jnp
from jax.experimental import pallas as pl
from jax.experimental.pallas import tpu as pltpu

LANES = 128      # vreg lane width
R_BLOCK = 8      # sublane rows per grid step -> one full f32 vreg of state


def lstm_kernel(p_ref, x_ref, out_ref):
    """Batched hidden=1 LSTM over the whole sequence + final Linear.

    p_ref  : SMEM (16,) f32 packed params
             [wih_i, wih_f, wih_g, wih_o,
              whh_i, whh_f, whh_g, whh_o,
              b_i,   b_f,   b_g,   b_o,     (b = b_ih + b_hh)
              w_lin, b_lin, pad, pad]        gate order [i, f, g, o] (PyTorch)
    x_ref  : VMEM (T, R_BLOCK, 128) f32 -- one input slab per timestep,
             sequences laid out over (sublane, lane)
    out_ref: VMEM (R_BLOCK, 128) f32    -- Linear(h_T) per sequence (lane-dense)
    """
    T = x_ref.shape[0]

    # Scalar parameters from SMEM (splat into vector ops, no XLU broadcasts).
    wih = [p_ref[k] for k in range(0, 4)]
    whh = [p_ref[k] for k in range(4, 8)]
    b = [p_ref[k] for k in range(8, 12)]
    w_lin = p_ref[12]
    b_lin = p_ref[13]

    x = x_ref[...]                                   # (T, R_BLOCK, 128)

    # Input-dependent gate terms for all timesteps, hoisted off the serial chain.
    pre_i = x * wih[0] + b[0]
    pre_f = x * wih[1] + b[1]
    pre_g = x * wih[2] + b[2]
    pre_o = x * wih[3] + b[3]

    state_shape = (x.shape[1], x.shape[2])
    h = jnp.zeros(state_shape, jnp.float32)
    c = jnp.zeros(state_shape, jnp.float32)

    # T is a static Python int -> fully unrolled (LLO sees the whole chain).
    for t in range(T):
        i_g = jax.nn.sigmoid(pre_i[t] + whh[0] * h)
        f_g = jax.nn.sigmoid(pre_f[t] + whh[1] * h)
        g_g = jnp.tanh(pre_g[t] + whh[2] * h)
        o_g = jax.nn.sigmoid(pre_o[t] + whh[3] * h)
        c = f_g * c + i_g * g_g
        h = o_g * jnp.tanh(c)

    # predictions[-1] == Linear(h_T) for every sequence in the block.
    out_ref[...] = h * w_lin + b_lin


def _pack_params(params):
    wih, whh, b, wlin, blin = params
    return jnp.concatenate([
        wih.reshape(-1), whh.reshape(-1), b.reshape(-1),
        wlin.reshape(-1), blin.reshape(-1),
        jnp.zeros((2,), jnp.float32),
    ]).astype(jnp.float32)


def simple_rnn_forward_batched(x_batch, params):
    """B independent sequences.  x_batch: (B, T) f32 -> (B,) last-step preds."""
    x_batch = x_batch.astype(jnp.float32)
    B, T = x_batch.shape
    packed = _pack_params(params)

    # Pad the batch so it tiles (R_BLOCK, 128) vregs exactly (lane-dense I/O).
    rows = -(-B // LANES)
    rows = -(-rows // R_BLOCK) * R_BLOCK
    Bp = rows * LANES
    x_pad = jnp.zeros((Bp, T), jnp.float32).at[:B].set(x_batch)
    # (T, rows, 128): sequence b -> (row = b // 128, lane = b % 128)
    x_slab = x_pad.T.reshape(T, rows, LANES)

    n_blocks = rows // R_BLOCK
    out = pl.pallas_call(
        lstm_kernel,
        out_shape=jax.ShapeDtypeStruct((rows, LANES), jnp.float32),
        grid=(n_blocks,),
        in_specs=[
            pl.BlockSpec(memory_space=pltpu.MemorySpace.SMEM),         # params
            pl.BlockSpec((T, R_BLOCK, LANES), lambda i: (0, i, 0)),    # x slab
        ],
        out_specs=pl.BlockSpec((R_BLOCK, LANES), lambda i: (i, 0)),
        compiler_params=pltpu.CompilerParams(
            dimension_semantics=("parallel",)),  # v7x: 2 TCs; no-op on v5e/v6e
    )(packed, x_slab)

    return out.reshape(Bp)[:B]


def simple_rnn_forward(x_seq, params):
    """Mirrors SimpleRnnNetwork.forward for one sequence: returns shape (1,)."""
    return simple_rnn_forward_batched(x_seq.reshape(1, -1), params)


def _reference(x_seq, params):
    """Pure-JAX reference of the same forward pass (sanity check)."""
    wih, whh, b, wlin, blin = params

    def step(carry, xt):
        h, c = carry
        pre = wih[0] * xt + whh[0] * h + b[0]      # (4,) gate pre-activations
        i = jax.nn.sigmoid(pre[0])
        f = jax.nn.sigmoid(pre[1])
        g = jnp.tanh(pre[2])
        o = jax.nn.sigmoid(pre[3])
        c = f * c + i * g
        h = o * jnp.tanh(c)
        return (h, c), h

    (h, _), _ = jax.lax.scan(step, (jnp.float32(0.0), jnp.float32(0.0)), x_seq)
    return h * wlin[0, 0] + blin[0, 0]


if __name__ == "__main__":
    key = jax.random.PRNGKey(0)
    kx, k1, k2, k3, k4, k5, k6 = jax.random.split(key, 7)

    T = 8   # sequence length
    B = 2   # independent sequences (kernel pads internally to a vreg tile)
    x_batch = jax.random.normal(kx, (B, T), dtype=jnp.float32)

    # Deterministic init mimicking PyTorch defaults:
    # LSTM/Linear params ~ U(-1/sqrt(hidden), 1/sqrt(hidden)) = U(-1,1), hidden=1.
    # PyTorch gate order for weight_ih / weight_hh / biases: [i, f, g, o].
    wih = jax.random.uniform(k1, (1, 4), jnp.float32, -1.0, 1.0)    # weight_ih_l0[:, 0]
    whh = jax.random.uniform(k2, (1, 4), jnp.float32, -1.0, 1.0)    # weight_hh_l0[:, 0]
    b_ih = jax.random.uniform(k3, (1, 4), jnp.float32, -1.0, 1.0)   # bias_ih_l0
    b_hh = jax.random.uniform(k4, (1, 4), jnp.float32, -1.0, 1.0)   # bias_hh_l0
    b = b_ih + b_hh
    wlin = jax.random.uniform(k5, (1, 1), jnp.float32, -1.0, 1.0)   # linear.weight
    blin = jax.random.uniform(k6, (1, 1), jnp.float32, -1.0, 1.0)   # linear.bias
    params = (wih, whh, b, wlin, blin)

    # Batched path (the performance path).
    out_batched = jax.block_until_ready(simple_rnn_forward_batched(x_batch, params))
    expected_batched = jax.vmap(lambda xs: _reference(xs, params))(x_batch)
    assert out_batched.shape == (B,), out_batched.shape
    assert jnp.allclose(out_batched, expected_batched, atol=1e-5, rtol=1e-5), (
        out_batched, expected_batched)

    # Single-sequence path mirroring SimpleRnnNetwork.forward -> shape (1,).
    out_single = jax.block_until_ready(simple_rnn_forward(x_batch[0], params))
    expected_single = _reference(x_batch[0], params)
    assert out_single.shape == (1,), out_single.shape
    assert jnp.allclose(out_single[0], expected_single, atol=1e-5, rtol=1e-5), (
        out_single, expected_single)

    print("KERNEL_OK")
</pallas_src>

<mosaic_0001>
module attributes {stable_mosaic.version = 11 : i64} {
  func.func @lstm_kernel(%arg0: i32, %arg1: memref<16xf32, #tpu.memory_space<smem>>, %arg2: memref<8x8x128xf32, #tpu.memory_space<vmem>>, %arg3: memref<8x128xf32, #tpu.memory_space<vmem>>) attributes {dimension_semantics = [#tpu.dimension_semantics<parallel>], iteration_bounds = array<i64: 1>, scalar_prefetch = 0 : i64, scratch_operands = 0 : i64, tpu.core_type = #tpu.core_type<tc>, window_params = [{transform_indices = @transform_0, window_bounds = array<i64: 16>}, {transform_indices = @transform_1, window_bounds = array<i64: 8, 8, 128>}, {transform_indices = @transform_2, window_bounds = array<i64: 8, 128>}]} {
    %c0 = arith.constant 0 : index
    %0 = memref.load %arg1[%c0] : memref<16xf32, #tpu.memory_space<smem>>
    %c1 = arith.constant 1 : index
    %1 = memref.load %arg1[%c1] : memref<16xf32, #tpu.memory_space<smem>>
    %c2 = arith.constant 2 : index
    %2 = memref.load %arg1[%c2] : memref<16xf32, #tpu.memory_space<smem>>
    %c3 = arith.constant 3 : index
    %3 = memref.load %arg1[%c3] : memref<16xf32, #tpu.memory_space<smem>>
    %c4 = arith.constant 4 : index
    %4 = memref.load %arg1[%c4] : memref<16xf32, #tpu.memory_space<smem>>
    %c5 = arith.constant 5 : index
    %5 = memref.load %arg1[%c5] : memref<16xf32, #tpu.memory_space<smem>>
    %c6 = arith.constant 6 : index
    %6 = memref.load %arg1[%c6] : memref<16xf32, #tpu.memory_space<smem>>
    %c7 = arith.constant 7 : index
    %7 = memref.load %arg1[%c7] : memref<16xf32, #tpu.memory_space<smem>>
    %c8 = arith.constant 8 : index
    %8 = memref.load %arg1[%c8] : memref<16xf32, #tpu.memory_space<smem>>
    %c9 = arith.constant 9 : index
    %9 = memref.load %arg1[%c9] : memref<16xf32, #tpu.memory_space<smem>>
    %c10 = arith.constant 10 : index
    %10 = memref.load %arg1[%c10] : memref<16xf32, #tpu.memory_space<smem>>
    %c11 = arith.constant 11 : index
    %11 = memref.load %arg1[%c11] : memref<16xf32, #tpu.memory_space<smem>>
    %c12 = arith.constant 12 : index
    %12 = memref.load %arg1[%c12] : memref<16xf32, #tpu.memory_space<smem>>
    %c13 = arith.constant 13 : index
    %13 = memref.load %arg1[%c13] : memref<16xf32, #tpu.memory_space<smem>>
    %c0_0 = arith.constant 0 : index
    %c0_1 = arith.constant 0 : index
    %c0_2 = arith.constant 0 : index
    %14 = vector.load %arg2[%c0_0, %c0_1, %c0_2] : memref<8x8x128xf32, #tpu.memory_space<vmem>>, vector<8x8x128xf32>
    %15 = vector.broadcast %0 : f32 to vector<8x8x128xf32>
    %16 = arith.mulf %14, %15 : vector<8x8x128xf32>
    %17 = vector.broadcast %8 : f32 to vector<8x8x128xf32>
    %18 = arith.addf %16, %17 : vector<8x8x128xf32>
    %19 = vector.broadcast %1 : f32 to vector<8x8x128xf32>
    %20 = arith.mulf %14, %19 : vector<8x8x128xf32>
    %21 = vector.broadcast %9 : f32 to vector<8x8x128xf32>
    %22 = arith.addf %20, %21 : vector<8x8x128xf32>
    %23 = vector.broadcast %2 : f32 to vector<8x8x128xf32>
    %24 = arith.mulf %14, %23 : vector<8x8x128xf32>
    %25 = vector.broadcast %10 : f32 to vector<8x8x128xf32>
    %26 = arith.addf %24, %25 : vector<8x8x128xf32>
    %27 = vector.broadcast %3 : f32 to vector<8x8x128xf32>
    %28 = arith.mulf %14, %27 : vector<8x8x128xf32>
    %29 = vector.broadcast %11 : f32 to vector<8x8x128xf32>
    %30 = arith.addf %28, %29 : vector<8x8x128xf32>
    %cst = arith.constant 0.000000e+00 : f32
    %31 = vector.broadcast %cst : f32 to vector<8x128xf32>
    %cst_3 = arith.constant 0.000000e+00 : f32
    %32 = vector.broadcast %cst_3 : f32 to vector<8x128xf32>
    %33 = vector.extract_strided_slice %18 {offsets = [0, 0, 0], sizes = [1, 8, 128], strides = [1, 1, 1]} : vector<8x8x128xf32> to vector<1x8x128xf32>
    %34 = vector.shape_cast %33 : vector<1x8x128xf32> to vector<8x128xf32>
    %35 = vector.broadcast %4 : f32 to vector<8x128xf32>
    %36 = arith.mulf %35, %31 : vector<8x128xf32>
    %37 = arith.addf %34, %36 : vector<8x128xf32>
    %38 = arith.negf %37 : vector<8x128xf32>
    %39 = math.exp %38 : vector<8x128xf32>
    %cst_4 = arith.constant 1.000000e+00 : f32
    %40 = vector.broadcast %cst_4 : f32 to vector<8x128xf32>
    %41 = arith.addf %40, %39 : vector<8x128xf32>
    %42 = arith.divf %40, %41 : vector<8x128xf32>
    %43 = vector.extract_strided_slice %22 {offsets = [0, 0, 0], sizes = [1, 8, 128], strides = [1, 1, 1]} : vector<8x8x128xf32> to vector<1x8x128xf32>
    %44 = vector.shape_cast %43 : vector<1x8x128xf32> to vector<8x128xf32>
    %45 = vector.broadcast %5 : f32 to vector<8x128xf32>
    %46 = arith.mulf %45, %31 : vector<8x128xf32>
    %47 = arith.addf %44, %46 : vector<8x128xf32>
    %48 = arith.negf %47 : vector<8x128xf32>
    %49 = math.exp %48 : vector<8x128xf32>
    %cst_5 = arith.constant 1.000000e+00 : f32
    %50 = vector.broadcast %cst_5 : f32 to vector<8x128xf32>
    %51 = arith.addf %50, %49 : vector<8x128xf32>
    %52 = arith.divf %50, %51 : vector<8x128xf32>
    %53 = vector.extract_strided_slice %26 {offsets = [0, 0, 0], sizes = [1, 8, 128], strides = [1, 1, 1]} : vector<8x8x128xf32> to vector<1x8x128xf32>
    %54 = vector.shape_cast %53 : vector<1x8x128xf32> to vector<8x128xf32>
    %55 = vector.broadcast %6 : f32 to vector<8x128xf32>
    %56 = arith.mulf %55, %31 : vector<8x128xf32>
    %57 = arith.addf %54, %56 : vector<8x128xf32>
    %58 = math.tanh %57 : vector<8x128xf32>
    %59 = vector.extract_strided_slice %30 {offsets = [0, 0, 0], sizes = [1, 8, 128], strides = [1, 1, 1]} : vector<8x8x128xf32> to vector<1x8x128xf32>
    %60 = vector.shape_cast %59 : vector<1x8x128xf32> to vector<8x128xf32>
    %61 = vector.broadcast %7 : f32 to vector<8x128xf32>
    %62 = arith.mulf %61, %31 : vector<8x128xf32>
    %63 = arith.addf %60, %62 : vector<8x128xf32>
    %64 = arith.negf %63 : vector<8x128xf32>
    %65 = math.exp %64 : vector<8x128xf32>
    %cst_6 = arith.constant 1.000000e+00 : f32
    %66 = vector.broadcast %cst_6 : f32 to vector<8x128xf32>
    %67 = arith.addf %66, %65 : vector<8x128xf32>
    %68 = arith.divf %66, %67 : vector<8x128xf32>
    %69 = arith.mulf %52, %32 : vector<8x128xf32>
    %70 = arith.mulf %42, %58 : vector<8x128xf32>
    %71 = arith.addf %69, %70 : vector<8x128xf32>
    %72 = math.tanh %71 : vector<8x128xf32>
    %73 = arith.mulf %68, %72 : vector<8x128xf32>
    %74 = vector.extract_strided_slice %18 {offsets = [1, 0, 0], sizes = [1, 8, 128], strides = [1, 1, 1]} : vector<8x8x128xf32> to vector<1x8x128xf32>
    %75 = vector.shape_cast %74 : vector<1x8x128xf32> to vector<8x128xf32>
    %76 = vector.broadcast %4 : f32 to vector<8x128xf32>
    %77 = arith.mulf %76, %73 : vector<8x128xf32>
    %78 = arith.addf %75, %77 : vector<8x128xf32>
    %79 = arith.negf %78 : vector<8x128xf32>
    %80 = math.exp %79 : vector<8x128xf32>
    %cst_7 = arith.constant 1.000000e+00 : f32
    %81 = vector.broadcast %cst_7 : f32 to vector<8x128xf32>
    %82 = arith.addf %81, %80 : vector<8x128xf32>
    %83 = arith.divf %81, %82 : vector<8x128xf32>
    %84 = vector.extract_strided_slice %22 {offsets = [1, 0, 0], sizes = [1, 8, 128], strides = [1, 1, 1]} : vector<8x8x128xf32> to vector<1x8x128xf32>
    %85 = vector.shape_cast %84 : vector<1x8x128xf32> to vector<8x128xf32>
    %86 = vector.broadcast %5 : f32 to vector<8x128xf32>
    %87 = arith.mulf %86, %73 : vector<8x128xf32>
    %88 = arith.addf %85, %87 : vector<8x128xf32>
    %89 = arith.negf %88 : vector<8x128xf32>
    %90 = math.exp %89 : vector<8x128xf32>
    %cst_8 = arith.constant 1.000000e+00 : f32
    %91 = vector.broadcast %cst_8 : f32 to vector<8x128xf32>
    %92 = arith.addf %91, %90 : vector<8x128xf32>
    %93 = arith.divf %91, %92 : vector<8x128xf32>
    %94 = vector.extract_strided_slice %26 {offsets = [1, 0, 0], sizes = [1, 8, 128], strides = [1, 1, 1]} : vector<8x8x128xf32> to vector<1x8x128xf32>
    %95 = vector.shape_cast %94 : vector<1x8x128xf32> to vector<8x128xf32>
    %96 = vector.broadcast %6 : f32 to vector<8x128xf32>
    %97 = arith.mulf %96, %73 : vector<8x128xf32>
    %98 = arith.addf %95, %97 : vector<8x128xf32>
    %99 = math.tanh %98 : vector<8x128xf32>
    %100 = vector.extract_strided_slice %30 {offsets = [1, 0, 0], sizes = [1, 8, 128], strides = [1, 1, 1]} : vector<8x8x128xf32> to vector<1x8x128xf32>
    %101 = vector.shape_cast %100 : vector<1x8x128xf32> to vector<8x128xf32>
    %102 = vector.broadcast %7 : f32 to vector<8x128xf32>
    %103 = arith.mulf %102, %73 : vector<8x128xf32>
    %104 = arith.addf %101, %103 : vector<8x128xf32>
    %105 = arith.negf %104 : vector<8x128xf32>
    %106 = math.exp %105 : vector<8x128xf32>
    %cst_9 = arith.constant 1.000000e+00 : f32
    %107 = vector.broadcast %cst_9 : f32 to vector<8x128xf32>
    %108 = arith.addf %107, %106 : vector<8x128xf32>
    %109 = arith.divf %107, %108 : vector<8x128xf32>
    %110 = arith.mulf %93, %71 : vector<8x128xf32>
    %111 = arith.mulf %83, %99 : vector<8x128xf32>
    %112 = arith.addf %110, %111 : vector<8x128xf32>
    %113 = math.tanh %112 : vector<8x128xf32>
    %114 = arith.mulf %109, %113 : vector<8x128xf32>
    %115 = vector.extract_strided_slice %18 {offsets = [2, 0, 0], sizes = [1, 8, 128], strides = [1, 1, 1]} : vector<8x8x128xf32> to vector<1x8x128xf32>
    %116 = vector.shape_cast %115 : vector<1x8x128xf32> to vector<8x128xf32>
    %117 = vector.broadcast %4 : f32 to vector<8x128xf32>
    %118 = arith.mulf %117, %114 : vector<8x128xf32>
    %119 = arith.addf %116, %118 : vector<8x128xf32>
    %120 = arith.negf %119 : vector<8x128xf32>
    %121 = math.exp %120 : vector<8x128xf32>
    %cst_10 = arith.constant 1.000000e+00 : f32
    %122 = vector.broadcast %cst_10 : f32 to vector<8x128xf32>
    %123 = arith.addf %122, %121 : vector<8x128xf32>
    %124 = arith.divf %122, %123 : vector<8x128xf32>
    %125 = vector.extract_strided_slice %22 {offsets = [2, 0, 0], sizes = [1, 8, 128], strides = [1, 1, 1]} : vector<8x8x128xf32> to vector<1x8x128xf32>
    %126 = vector.shape_cast %125 : vector<1x8x128xf32> to vector<8x128xf32>
    %127 = vector.broadcast %5 : f32 to vector<8x128xf32>
    %128 = arith.mulf %127, %114 : vector<8x128xf32>
    %129 = arith.addf %126, %128 : vector<8x128xf32>
    %130 = arith.negf %129 : vector<8x128xf32>
    %131 = math.exp %130 : vector<8x128xf32>
    %cst_11 = arith.constant 1.000000e+00 : f32
    %132 = vector.broadcast %cst_11 : f32 to vector<8x128xf32>
    %133 = arith.addf %132, %131 : vector<8x128xf32>
    %134 = arith.divf %132, %133 : vector<8x128xf32>
    %135 = vector.extract_strided_slice %26 {offsets = [2, 0, 0], sizes = [1, 8, 128], strides = [1, 1, 1]} : vector<8x8x128xf32> to vector<1x8x128xf32>
    %136 = vector.shape_cast %135 : vector<1x8x128xf32> to vector<8x128xf32>
    %137 = vector.broadcast %6 : f32 to vector<8x128xf32>
    %138 = arith.mulf %137, %114 : vector<8x128xf32>
    %139 = arith.addf %136, %138 : vector<8x128xf32>
    %140 = math.tanh %139 : vector<8x128xf32>
    %141 = vector.extract_strided_slice %30 {offsets = [2, 0, 0], sizes = [1, 8, 128], strides = [1, 1, 1]} : vector<8x8x128xf32> to vector<1x8x128xf32>
    %142 = vector.shape_cast %141 : vector<1x8x128xf32> to vector<8x128xf32>
    %143 = vector.broadcast %7 : f32 to vector<8x128xf32>
    %144 = arith.mulf %143, %114 : vector<8x128xf32>
    %145 = arith.addf %142, %144 : vector<8x128xf32>
    %146 = arith.negf %145 : vector<8x128xf32>
    %147 = math.exp %146 : vector<8x128xf32>
    %cst_12 = arith.constant 1.000000e+00 : f32
    %148 = vector.broadcast %cst_12 : f32 to vector<8x128xf32>
    %149 = arith.addf %148, %147 : vector<8x128xf32>
    %150 = arith.divf %148, %149 : vector<8x128xf32>
    %151 = arith.mulf %134, %112 : vector<8x128xf32>
    %152 = arith.mulf %124, %140 : vector<8x128xf32>
    %153 = arith.addf %151, %152 : vector<8x128xf32>
    %154 = math.tanh %153 : vector<8x128xf32>
    %155 = arith.mulf %150, %154 : vector<8x128xf32>
    %156 = vector.extract_strided_slice %18 {offsets = [3, 0, 0], sizes = [1, 8, 128], strides = [1, 1, 1]} : vector<8x8x128xf32> to vector<1x8x128xf32>
    %157 = vector.shape_cast %156 : vector<1x8x128xf32> to vector<8x128xf32>
    %158 = vector.broadcast %4 : f32 to vector<8x128xf32>
    %159 = arith.mulf %158, %155 : vector<8x128xf32>
    %160 = arith.addf %157, %159 : vector<8x128xf32>
    %161 = arith.negf %160 : vector<8x128xf32>
    %162 = math.exp %161 : vector<8x128xf32>
    %cst_13 = arith.constant 1.000000e+00 : f32
    %163 = vector.broadcast %cst_13 : f32 to vector<8x128xf32>
    %164 = arith.addf %163, %162 : vector<8x128xf32>
    %165 = arith.divf %163, %164 : vector<8x128xf32>
    %166 = vector.extract_strided_slice %22 {offsets = [3, 0, 0], sizes = [1, 8, 128], strides = [1, 1, 1]} : vector<8x8x128xf32> to vector<1x8x128xf32>
    %167 = vector.shape_cast %166 : vector<1x8x128xf32> to vector<8x128xf32>
    %168 = vector.broadcast %5 : f32 to vector<8x128xf32>
    %169 = arith.mulf %168, %155 : vector<8x128xf32>
    %170 = arith.addf %167, %169 : vector<8x128xf32>
    %171 = arith.negf %170 : vector<8x128xf32>
    %172 = math.exp %171 : vector<8x128xf32>
    %cst_14 = arith.constant 1.000000e+00 : f32
    %173 = vector.broadcast %cst_14 : f32 to vector<8x128xf32>
    %174 = arith.addf %173, %172 : vector<8x128xf32>
    %175 = arith.divf %173, %174 : vector<8x128xf32>
    %176 = vector.extract_strided_slice %26 {offsets = [3, 0, 0], sizes = [1, 8, 128], strides = [1, 1, 1]} : vector<8x8x128xf32> to vector<1x8x128xf32>
    %177 = vector.shape_cast %176 : vector<1x8x128xf32> to vector<8x128xf32>
    %178 = vector.broadcast %6 : f32 to vector<8x128xf32>
    %179 = arith.mulf %178, %155 : vector<8x128xf32>
    %180 = arith.addf %177, %179 : vector<8x128xf32>
    %181 = math.tanh %180 : vector<8x128xf32>
    %182 = vector.extract_strided_slice %30 {offsets = [3, 0, 0], sizes = [1, 8, 128], strides = [1, 1, 1]} : vector<8x8x128xf32> to vector<1x8x128xf32>
    %183 = vector.shape_cast %182 : vector<1x8x128xf32> to vector<8x128xf32>
    %184 = vector.broadcast %7 : f32 to vector<8x128xf32>
    %185 = arith.mulf %184, %155 : vector<8x128xf32>
    %186 = arith.addf %183, %185 : vector<8x128xf32>
    %187 = arith.negf %186 : vector<8x128xf32>
    %188 = math.exp %187 : vector<8x128xf32>
    %cst_15 = arith.constant 1.000000e+00 : f32
    %189 = vector.broadcast %cst_15 : f32 to vector<8x128xf32>
    %190 = arith.addf %189, %188 : vector<8x128xf32>
    %191 = arith.divf %189, %190 : vector<8x128xf32>
    %192 = arith.mulf %175, %153 : vector<8x128xf32>
    %193 = arith.mulf %165, %181 : vector<8x128xf32>
    %194 = arith.addf %192, %193 : vector<8x128xf32>
    %195 = math.tanh %194 : vector<8x128xf32>
    %196 = arith.mulf %191, %195 : vector<8x128xf32>
    %197 = vector.extract_strided_slice %18 {offsets = [4, 0, 0], sizes = [1, 8, 128], strides = [1, 1, 1]} : vector<8x8x128xf32> to vector<1x8x128xf32>
    %198 = vector.shape_cast %197 : vector<1x8x128xf32> to vector<8x128xf32>
    %199 = vector.broadcast %4 : f32 to vector<8x128xf32>
    %200 = arith.mulf %199, %196 : vector<8x128xf32>
    %201 = arith.addf %198, %200 : vector<8x128xf32>
    %202 = arith.negf %201 : vector<8x128xf32>
    %203 = math.exp %202 : vector<8x128xf32>
    %cst_16 = arith.constant 1.000000e+00 : f32
    %204 = vector.broadcast %cst_16 : f32 to vector<8x128xf32>
    %205 = arith.addf %204, %203 : vector<8x128xf32>
    %206 = arith.divf %204, %205 : vector<8x128xf32>
    %207 = vector.extract_strided_slice %22 {offsets = [4, 0, 0], sizes = [1, 8, 128], strides = [1, 1, 1]} : vector<8x8x128xf32> to vector<1x8x128xf32>
    %208 = vector.shape_cast %207 : vector<1x8x128xf32> to vector<8x128xf32>
    %209 = vector.broadcast %5 : f32 to vector<8x128xf32>
    %210 = arith.mulf %209, %196 : vector<8x128xf32>
    %211 = arith.addf %208, %210 : vector<8x128xf32>
    %212 = arith.negf %211 : vector<8x128xf32>
    %213 = math.exp %212 : vector<8x128xf32>
    %cst_17 = arith.constant 1.000000e+00 : f32
    %214 = vector.broadcast %cst_17 : f32 to vector<8x128xf32>
    %215 = arith.addf %214, %213 : vector<8x128xf32>
    %216 = arith.divf %214, %215 : vector<8x128xf32>
    %217 = vector.extract_strided_slice %26 {offsets = [4, 0, 0], sizes = [1, 8, 128], strides = [1, 1, 1]} : vector<8x8x128xf32> to vector<1x8x128xf32>
    %218 = vector.shape_cast %217 : vector<1x8x128xf32> to vector<8x128xf32>
    %219 = vector.broadcast %6 : f32 to vector<8x128xf32>
    %220 = arith.mulf %219, %196 : vector<8x128xf32>
    %221 = arith.addf %218, %220 : vector<8x128xf32>
    %222 = math.tanh %221 : vector<8x128xf32>
    %223 = vector.extract_strided_slice %30 {offsets = [4, 0, 0], sizes = [1, 8, 128], strides = [1, 1, 1]} : vector<8x8x128xf32> to vector<1x8x128xf32>
    %224 = vector.shape_cast %223 : vector<1x8x128xf32> to vector<8x128xf32>
    %225 = vector.broadcast %7 : f32 to vector<8x128xf32>
    %226 = arith.mulf %225, %196 : vector<8x128xf32>
    %227 = arith.addf %224, %226 : vector<8x128xf32>
    %228 = arith.negf %227 : vector<8x128xf32>
    %229 = math.exp %228 : vector<8x128xf32>
    %cst_18 = arith.constant 1.000000e+00 : f32
    %230 = vector.broadcast %cst_18 : f32 to vector<8x128xf32>
    %231 = arith.addf %230, %229 : vector<8x128xf32>
    %232 = arith.divf %230, %231 : vector<8x128xf32>
    %233 = arith.mulf %216, %194 : vector<8x128xf32>
    %234 = arith.mulf %206, %222 : vector<8x128xf32>
    %235 = arith.addf %233, %234 : vector<8x128xf32>
    %236 = math.tanh %235 : vector<8x128xf32>
    %237 = arith.mulf %232, %236 : vector<8x128xf32>
    %238 = vector.extract_strided_slice %18 {offsets = [5, 0, 0], sizes = [1, 8, 128], strides = [1, 1, 1]} : vector<8x8x128xf32> to vector<1x8x128xf32>
    %239 = vector.shape_cast %238 : vector<1x8x128xf32> to vector<8x128xf32>
    %240 = vector.broadcast %4 : f32 to vector<8x128xf32>
    %241 = arith.mulf %240, %237 : vector<8x128xf32>
    %242 = arith.addf %239, %241 : vector<8x128xf32>
    %243 = arith.negf %242 : vector<8x128xf32>
    %244 = math.exp %243 : vector<8x128xf32>
    %cst_19 = arith.constant 1.000000e+00 : f32
    %245 = vector.broadcast %cst_19 : f32 to vector<8x128xf32>
    %246 = arith.addf %245, %244 : vector<8x128xf32>
    %247 = arith.divf %245, %246 : vector<8x128xf32>
    %248 = vector.extract_strided_slice %22 {offsets = [5, 0, 0], sizes = [1, 8, 128], strides = [1, 1, 1]} : vector<8x8x128xf32> to vector<1x8x128xf32>
    %249 = vector.shape_cast %248 : vector<1x8x128xf32> to vector<8x128xf32>
    %250 = vector.broadcast %5 : f32 to vector<8x128xf32>
    %251 = arith.mulf %250, %237 : vector<8x128xf32>
    %252 = arith.addf %249, %251 : vector<8x128xf32>
    %253 = arith.negf %252 : vector<8x128xf32>
    %254 = math.exp %253 : vector<8x128xf32>
    %cst_20 = arith.constant 1.000000e+00 : f32
    %255 = vector.broadcast %cst_20 : f32 to vector<8x128xf32>
    %256 = arith.addf %255, %254 : vector<8x128xf32>
    %257 = arith.divf %255, %256 : vector<8x128xf32>
    %258 = vector.extract_strided_slice %26 {offsets = [5, 0, 0], sizes = [1, 8, 128], strides = [1, 1, 1]} : vector<8x8x128xf32> to vector<1x8x128xf32>
    %259 = vector.shape_cast %258 : vector<1x8x128xf32> to vector<8x128xf32>
    %260 = vector.broadcast %6 : f32 to vector<8x128xf32>
    %261 = arith.mulf %260, %237 : vector<8x128xf32>
    %262 = arith.addf %259, %261 : vector<8x128xf32>
    %263 = math.tanh %262 : vector<8x128xf32>
    %264 = vector.extract_strided_slice %30 {offsets = [5, 0, 0], sizes = [1, 8, 128], strides = [1, 1, 1]} : vector<8x8x128xf32> to vector<1x8x128xf32>
    %265 = vector.shape_cast %264 : vector<1x8x128xf32> to vector<8x128xf32>
    %266 = vector.broadcast %7 : f32 to vector<8x128xf32>
    %267 = arith.mulf %266, %237 : vector<8x128xf32>
    %268 = arith.addf %265, %267 : vector<8x128xf32>
    %269 = arith.negf %268 : vector<8x128xf32>
    %270 = math.exp %269 : vector<8x128xf32>
    %cst_21 = arith.constant 1.000000e+00 : f32
    %271 = vector.broadcast %cst_21 : f32 to vector<8x128xf32>
    %272 = arith.addf %271, %270 : vector<8x128xf32>
    %273 = arith.divf %271, %272 : vector<8x128xf32>
    %274 = arith.mulf %257, %235 : vector<8x128xf32>
    %275 = arith.mulf %247, %263 : vector<8x128xf32>
    %276 = arith.addf %274, %275 : vector<8x128xf32>
    %277 = math.tanh %276 : vector<8x128xf32>
    %278 = arith.mulf %273, %277 : vector<8x128xf32>
    %279 = vector.extract_strided_slice %18 {offsets = [6, 0, 0], sizes = [1, 8, 128], strides = [1, 1, 1]} : vector<8x8x128xf32> to vector<1x8x128xf32>
    %280 = vector.shape_cast %279 : vector<1x8x128xf32> to vector<8x128xf32>
    %281 = vector.broadcast %4 : f32 to vector<8x128xf32>
    %282 = arith.mulf %281, %278 : vector<8x128xf32>
    %283 = arith.addf %280, %282 : vector<8x128xf32>
    %284 = arith.negf %283 : vector<8x128xf32>
    %285 = math.exp %284 : vector<8x128xf32>
    %cst_22 = arith.constant 1.000000e+00 : f32
    %286 = vector.broadcast %cst_22 : f32 to vector<8x128xf32>
    %287 = arith.addf %286, %285 : vector<8x128xf32>
    %288 = arith.divf %286, %287 : vector<8x128xf32>
    %289 = vector.extract_strided_slice %22 {offsets = [6, 0, 0], sizes = [1, 8, 128], strides = [1, 1, 1]} : vector<8x8x128xf32> to vector<1x8x128xf32>
    %290 = vector.shape_cast %289 : vector<1x8x128xf32> to vector<8x128xf32>
    %291 = vector.broadcast %5 : f32 to vector<8x128xf32>
    %292 = arith.mulf %291, %278 : vector<8x128xf32>
    %293 = arith.addf %290, %292 : vector<8x128xf32>
    %294 = arith.negf %293 : vector<8x128xf32>
    %295 = math.exp %294 : vector<8x128xf32>
    %cst_23 = arith.constant 1.000000e+00 : f32
    %296 = vector.broadcast %cst_23 : f32 to vector<8x128xf32>
    %297 = arith.addf %296, %295 : vector<8x128xf32>
    %298 = arith.divf %296, %297 : vector<8x128xf32>
    %299 = vector.extract_strided_slice %26 {offsets = [6, 0, 0], sizes = [1, 8, 128], strides = [1, 1, 1]} : vector<8x8x128xf32> to vector<1x8x128xf32>
    %300 = vector.shape_cast %299 : vector<1x8x128xf32> to vector<8x128xf32>
    %301 = vector.broadcast %6 : f32 to vector<8x128xf32>
    %302 = arith.mulf %301, %278 : vector<8x128xf32>
    %303 = arith.addf %300, %302 : vector<8x128xf32>
    %304 = math.tanh %303 : vector<8x128xf32>
    %305 = vector.extract_strided_slice %30 {offsets = [6, 0, 0], sizes = [1, 8, 128], strides = [1, 1, 1]} : vector<8x8x128xf32> to vector<1x8x128xf32>
    %306 = vector.shape_cast %305 : vector<1x8x128xf32> to vector<8x128xf32>
    %307 = vector.broadcast %7 : f32 to vector<8x128xf32>
    %308 = arith.mulf %307, %278 : vector<8x128xf32>
    %309 = arith.addf %306, %308 : vector<8x128xf32>
    %310 = arith.negf %309 : vector<8x128xf32>
    %311 = math.exp %310 : vector<8x128xf32>
    %cst_24 = arith.constant 1.000000e+00 : f32
    %312 = vector.broadcast %cst_24 : f32 to vector<8x128xf32>
    %313 = arith.addf %312, %311 : vector<8x128xf32>
    %314 = arith.divf %312, %313 : vector<8x128xf32>
    %315 = arith.mulf %298, %276 : vector<8x128xf32>
    %316 = arith.mulf %288, %304 : vector<8x128xf32>
    %317 = arith.addf %315, %316 : vector<8x128xf32>
    %318 = math.tanh %317 : vector<8x128xf32>
    %319 = arith.mulf %314, %318 : vector<8x128xf32>
    %320 = vector.extract_strided_slice %18 {offsets = [7, 0, 0], sizes = [1, 8, 128], strides = [1, 1, 1]} : vector<8x8x128xf32> to vector<1x8x128xf32>
    %321 = vector.shape_cast %320 : vector<1x8x128xf32> to vector<8x128xf32>
    %322 = vector.broadcast %4 : f32 to vector<8x128xf32>
    %323 = arith.mulf %322, %319 : vector<8x128xf32>
    %324 = arith.addf %321, %323 : vector<8x128xf32>
    %325 = arith.negf %324 : vector<8x128xf32>
    %326 = math.exp %325 : vector<8x128xf32>
    %cst_25 = arith.constant 1.000000e+00 : f32
    %327 = vector.broadcast %cst_25 : f32 to vector<8x128xf32>
    %328 = arith.addf %327, %326 : vector<8x128xf32>
    %329 = arith.divf %327, %328 : vector<8x128xf32>
    %330 = vector.extract_strided_slice %22 {offsets = [7, 0, 0], sizes = [1, 8, 128], strides = [1, 1, 1]} : vector<8x8x128xf32> to vector<1x8x128xf32>
    %331 = vector.shape_cast %330 : vector<1x8x128xf32> to vector<8x128xf32>
    %332 = vector.broadcast %5 : f32 to vector<8x128xf32>
    %333 = arith.mulf %332, %319 : vector<8x128xf32>
    %334 = arith.addf %331, %333 : vector<8x128xf32>
    %335 = arith.negf %334 : vector<8x128xf32>
    %336 = math.exp %335 : vector<8x128xf32>
    %cst_26 = arith.constant 1.000000e+00 : f32
    %337 = vector.broadcast %cst_26 : f32 to vector<8x128xf32>
    %338 = arith.addf %337, %336 : vector<8x128xf32>
    %339 = arith.divf %337, %338 : vector<8x128xf32>
    %340 = vector.extract_strided_slice %26 {offsets = [7, 0, 0], sizes = [1, 8, 128], strides = [1, 1, 1]} : vector<8x8x128xf32> to vector<1x8x128xf32>
    %341 = vector.shape_cast %340 : vector<1x8x128xf32> to vector<8x128xf32>
    %342 = vector.broadcast %6 : f32 to vector<8x128xf32>
    %343 = arith.mulf %342, %319 : vector<8x128xf32>
    %344 = arith.addf %341, %343 : vector<8x128xf32>
    %345 = math.tanh %344 : vector<8x128xf32>
    %346 = vector.extract_strided_slice %30 {offsets = [7, 0, 0], sizes = [1, 8, 128], strides = [1, 1, 1]} : vector<8x8x128xf32> to vector<1x8x128xf32>
    %347 = vector.shape_cast %346 : vector<1x8x128xf32> to vector<8x128xf32>
    %348 = vector.broadcast %7 : f32 to vector<8x128xf32>
    %349 = arith.mulf %348, %319 : vector<8x128xf32>
    %350 = arith.addf %347, %349 : vector<8x128xf32>
    %351 = arith.negf %350 : vector<8x128xf32>
    %352 = math.exp %351 : vector<8x128xf32>
    %cst_27 = arith.constant 1.000000e+00 : f32
    %353 = vector.broadcast %cst_27 : f32 to vector<8x128xf32>
    %354 = arith.addf %353, %352 : vector<8x128xf32>
    %355 = arith.divf %353, %354 : vector<8x128xf32>
    %356 = arith.mulf %339, %317 : vector<8x128xf32>
    %357 = arith.mulf %329, %345 : vector<8x128xf32>
    %358 = arith.addf %356, %357 : vector<8x128xf32>
    %359 = math.tanh %358 : vector<8x128xf32>
    %360 = arith.mulf %355, %359 : vector<8x128xf32>
    %361 = vector.broadcast %12 : f32 to vector<8x128xf32>
    %362 = arith.mulf %360, %361 : vector<8x128xf32>
    %363 = vector.broadcast %13 : f32 to vector<8x128xf32>
    %364 = arith.addf %362, %363 : vector<8x128xf32>
    %c0_28 = arith.constant 0 : index
    %c0_29 = arith.constant 0 : index
    %365 = vector.load %arg3[%c0_28, %c0_29] : memref<8x128xf32, #tpu.memory_space<vmem>>, vector<8x128xf32>
    tpu.vector_store %arg3[%c0_28, %c0_29], %364 {strides = array<i32>} : memref<8x128xf32, #tpu.memory_space<vmem>>, vector<8x128xf32>,
    return
  }
  func.func @transform_0(%arg0: i32) -> i32 {
    %c0_i32 = arith.constant 0 : i32
    %c0_i32_0 = arith.constant 0 : i32
    return %c0_i32 : i32
  }
  func.func @transform_1(%arg0: i32) -> (i32, i32, i32) {
    %c0_i32 = arith.constant 0 : i32
    %c0_i32_0 = arith.constant 0 : i32
    %c0_i32_1 = arith.constant 0 : i32
    return %c0_i32, %arg0, %c0_i32_0 : i32, i32, i32
  }
  func.func @transform_2(%arg0: i32) -> (i32, i32) {
    %c0_i32 = arith.constant 0 : i32
    %c0_i32_0 = arith.constant 0 : i32
    return %arg0, %c0_i32 : i32, i32
  }
}

</mosaic_0001>

<llo_original>
// kernel: tpu_custom_call.1
$region0: #{tpu_custom_call.1}
  #allocation0 [shape = 'u32[]', space=smem, size = 0x4, offset = 0x4, fixed_abs, tag = 'smem constant byte address 0x4 - core index']
  #allocation1 [shape = 'u32[144,128]{1,0:T(1,128)}', space=vmem, size = 0x12000, scoped, tag = 'internal scratch']
  %s0 = inlined_call_operand.hbm [shape: f32[16], index: 0, kind: input, shape index: {}]
  %s1 = inlined_call_operand.hbm [shape: f32[8,8,128], index: 1, kind: input, shape index: {}]
  %s2 = inlined_call_operand.hbm [shape: f32[8,128], index: 2, kind: output, shape index: {}]
  %s3 = sld [smem:[#allocation0]]
  $region26: #{tpu_custom_call.1} parent=0
    _
  %s5 = ssub.s32 1, %s3
  %s6 = scalar_select 0, %s5, %s3
  $region1: #{tpu_custom_call.1} parent=0
    #allocation2 [shape = 'u8[512]{0}', space=smem, size = 0x200, scoped, tag = 'input window, operand 0, single buffered']
    #allocation3 [shape = 's32[1]{0}', space=sflag, size = 0x4, scoped, tag = 'scoped memory for tpu_custom_call.1']
    #allocation4 [shape = 's32[1]{0}', space=sflag, size = 0x4, scoped, tag = 'scoped memory for tpu_custom_call.1']
    #allocation5 [shape = 's32[1]{0}', space=sflag, size = 0x4, scoped, tag = 'scoped memory for tpu_custom_call.1']
    #allocation6 [shape = 'u8[32768]{0}', space=vmem, size = 0x8000, scoped, tag = 'input window, operand 1, single buffered']
    #allocation7 [shape = 'u8[4096]{0}', space=vmem, size = 0x1000, scoped, tag = 'output window, operand 0, single buffered']
    %7 = vsyncpa [#allocation5], 0
    %8 = vsyncpa [#allocation3], 0
    %9 = vsyncpa [#allocation4], 0
    // Predicated region
    $region2: #{tpu_custom_call.1} parent=1 // pred_check
      _
    $region3: #{tpu_custom_call.1} parent=1 // pred_check_branch
      %11 = sbr.rel (0) target = $region5
    $region4: #{tpu_custom_call.1} parent=1 // pred_region
      %s13 = ssub.s32 16, 16
      %14 = vsyncadd [#allocation5], %s13
      %17 = dma.hbm_to_smem %s0, 16, [#allocation2], [#allocation5]
    $region5: #{tpu_custom_call.1} parent=1 // pred_fallthru
      _
    // Predicated region
    $region6: #{tpu_custom_call.1} parent=1 // pred_check
      _
    $region7: #{tpu_custom_call.1} parent=1 // pred_check_branch
      %19 = sbr.rel (0) target = $region9
    $region8: #{tpu_custom_call.1} parent=1 // pred_region
      %s21 = ssub.s32 1024, 1024
      %22 = vsyncadd [#allocation3], %s21
      %s23 = sshll.u32 [#allocation6], 4
      %s24 = int_to_ptr.vmem [resolvable:$true] %s23
      %29 = dma.hbm_to_vmem [thread:$0]  %s1, 1024, %s24, [#allocation3], 128, 128, 8
    $region9: #{tpu_custom_call.1} parent=1 // pred_fallthru
      _
    // Predicated region
    $region10: #{tpu_custom_call.1} parent=1 // pred_check
      _
    $region11: #{tpu_custom_call.1} parent=1 // pred_check_branch
      %31 = sbr.rel (0) target = $region13
    $region12: #{tpu_custom_call.1} parent=1 // pred_region
      %32 = dma.done [#allocation5], 16
    $region13: #{tpu_custom_call.1} parent=1 // pred_fallthru
      _
    // Predicated region
    $region14: #{tpu_custom_call.1} parent=1 // pred_check
      _
    $region15: #{tpu_custom_call.1} parent=1 // pred_check_branch
      %34 = sbr.rel (0) target = $region17
    $region16: #{tpu_custom_call.1} parent=1 // pred_region
      %35 = dma.done [#allocation3], 1024
    $region17: #{tpu_custom_call.1} parent=1 // pred_fallthru
      _
    %36 = sfence
    %s37 = sld [smem:[#allocation2]]
    %s38 = sld [smem:[#allocation2 + $0x1]]
    %s39 = sld [smem:[#allocation2 + $0x2]]
    %s40 = sld [smem:[#allocation2 + $0x3]]
    %s41 = sld [smem:[#allocation2 + $0x4]]
    %s42 = sld [smem:[#allocation2 + $0x5]]
    %s43 = sld [smem:[#allocation2 + $0x6]]
    %s44 = sld [smem:[#allocation2 + $0x7]]
    %s45 = sld [smem:[#allocation2 + $0x8]]
    %s46 = sld [smem:[#allocation2 + $0x9]]
    %s47 = sld [smem:[#allocation2 + $0xa]]
    %s48 = sld [smem:[#allocation2 + $0xb]]
    %s49 = sld [smem:[#allocation2 + $0xc]]
    %s50 = sld [smem:[#allocation2 + $0xd]]
    %v51 = vld [vmem:[#allocation6] sm:$0xff]
    %v52 = vld [vmem:[#allocation6 + $0x8] sm:$0xff]
    %v53 = vld [vmem:[#allocation6 + $0x10] sm:$0xff]
    %v54 = vld [vmem:[#allocation6 + $0x18] sm:$0xff]
    %v55 = vld [vmem:[#allocation6 + $0x20] sm:$0xff]
    %v56 = vld [vmem:[#allocation6 + $0x28] sm:$0xff]
    %v57 = vld [vmem:[#allocation6 + $0x30] sm:$0xff]
    %v58 = vld [vmem:[#allocation6 + $0x38] sm:$0xff]
    %v59 = vstv %s37
    %v60 = vmul.f32 %v51, %v59
    %v61 = vmul.f32 %v52, %v59
    %v62 = vmul.f32 %v53, %v59
    %v63 = vmul.f32 %v54, %v59
    %v64 = vmul.f32 %v55, %v59
    %v65 = vmul.f32 %v56, %v59
    %v66 = vmul.f32 %v57, %v59
    %v67 = vmul.f32 %v58, %v59
    %v68 = vstv %s45
    %v69 = vadd.f32 %v60, %v68
    %v70 = vadd.f32 %v61, %v68
    %v71 = vadd.f32 %v62, %v68
    %v72 = vadd.f32 %v63, %v68
    %v73 = vadd.f32 %v64, %v68
    %v74 = vadd.f32 %v65, %v68
    %v75 = vadd.f32 %v66, %v68
    %v76 = vadd.f32 %v67, %v68
    %v77 = vstv %s38
    %v78 = vmul.f32 %v51, %v77
    %v79 = vmul.f32 %v52, %v77
    %v80 = vmul.f32 %v53, %v77
    %v81 = vmul.f32 %v54, %v77
    %v82 = vmul.f32 %v55, %v77
    %v83 = vmul.f32 %v56, %v77
    %v84 = vmul.f32 %v57, %v77
    %v85 = vmul.f32 %v58, %v77
    %v86 = vstv %s46
    %v87 = vadd.f32 %v78, %v86
    %v88 = vadd.f32 %v79, %v86
    %v89 = vadd.f32 %v80, %v86
    %v90 = vadd.f32 %v81, %v86
    %v91 = vadd.f32 %v82, %v86
    %v92 = vadd.f32 %v83, %v86
    %v93 = vadd.f32 %v84, %v86
    %v94 = vadd.f32 %v85, %v86
    %v95 = vstv %s39
    %v96 = vmul.f32 %v51, %v95
    %v97 = vmul.f32 %v52, %v95
    %v98 = vmul.f32 %v53, %v95
    %v99 = vmul.f32 %v54, %v95
    %v100 = vmul.f32 %v55, %v95
    %v101 = vmul.f32 %v56, %v95
    %v102 = vmul.f32 %v57, %v95
    %v103 = vmul.f32 %v58, %v95
    %v104 = vstv %s47
    %v105 = vadd.f32 %v96, %v104
    %v106 = vadd.f32 %v97, %v104
    %v107 = vadd.f32 %v98, %v104
    %v108 = vadd.f32 %v99, %v104
    %v109 = vadd.f32 %v100, %v104
    %v110 = vadd.f32 %v101, %v104
    %v111 = vadd.f32 %v102, %v104
    %v112 = vadd.f32 %v103, %v104
    %v113 = vstv %s40
    %v114 = vmul.f32 %v51, %v113
    %v115 = vmul.f32 %v52, %v113
    %v116 = vmul.f32 %v53, %v113
    %v117 = vmul.f32 %v54, %v113
    %v118 = vmul.f32 %v55, %v113
    %v119 = vmul.f32 %v56, %v113
    %v120 = vmul.f32 %v57, %v113
    %v121 = vmul.f32 %v58, %v113
    %v122 = vstv %s48
    %v123 = vadd.f32 %v114, %v122
    %v124 = vadd.f32 %v115, %v122
    %v125 = vadd.f32 %v116, %v122
    %v126 = vadd.f32 %v117, %v122
    %v127 = vadd.f32 %v118, %v122
    %v128 = vadd.f32 %v119, %v122
    %v129 = vadd.f32 %v120, %v122
    %v130 = vadd.f32 %v121, %v122
    %v131 = vstv %s41
    %v132 = vmul.f32 %v131, 0.0
    %v133 = vadd.f32 %v69, %v132
    %v134 = vxor.u32 %v133, 2147483648
    %v135 = vmul.f32 %v134, 1.442695
    %v136 = vpow.pop %v135
    %v137 = vadd.f32 %v136, 1.0
    %v138 = vrcp.pop %v137
    %v139 = vmul.f32 1.0, %v138
    %v140 = vstv %s42
    %v141 = vmul.f32 %v140, 0.0
    %v142 = vadd.f32 %v87, %v141
    %v143 = vxor.u32 %v142, 2147483648
    %v144 = vmul.f32 %v143, 1.442695
    %v145 = vpow.pop %v144
    %v146 = vadd.f32 %v145, 1.0
    %v147 = vrcp.pop %v146
    %v148 = vmul.f32 1.0, %v147
    %v149 = vstv %s43
    %v150 = vmul.f32 %v149, 0.0
    %v151 = vadd.f32 %v105, %v150
    %v152 = vtanh.pop %v151
    %v153 = vstv %s44
    %v154 = vmul.f32 %v153, 0.0
    %v155 = vadd.f32 %v123, %v154
    %v156 = vxor.u32 %v155, 2147483648
    %v157 = vmul.f32 %v156, 1.442695
    %v158 = vpow.pop %v157
    %v159 = vadd.f32 %v158, 1.0
    %v160 = vrcp.pop %v159
    %v161 = vmul.f32 1.0, %v160
    %v162 = vmul.f32 %v148, 0.0
    %v163 = vmul.f32 %v139, %v152
    %v164 = vadd.f32 %v162, %v163
    %v165 = vtanh.pop %v164
    %v166 = vmul.f32 %v161, %v165
    %v167 = vmul.f32 %v131, %v166
    %v168 = vadd.f32 %v70, %v167
    %v169 = vxor.u32 %v168, 2147483648
    %v170 = vmul.f32 %v169, 1.442695
    %v171 = vpow.pop %v170
    %v172 = vadd.f32 %v171, 1.0
    %v173 = vrcp.pop %v172
    %v174 = vmul.f32 1.0, %v173
    %v175 = vmul.f32 %v140, %v166
    %v176 = vadd.f32 %v88, %v175
    %v177 = vxor.u32 %v176, 2147483648
    %v178 = vmul.f32 %v177, 1.442695
    %v179 = vpow.pop %v178
    %v180 = vadd.f32 %v179, 1.0
    %v181 = vrcp.pop %v180
    %v182 = vmul.f32 1.0, %v181
    %v183 = vmul.f32 %v149, %v166
    %v184 = vadd.f32 %v106, %v183
    %v185 = vtanh.pop %v184
    %v186 = vmul.f32 %v153, %v166
    %v187 = vadd.f32 %v124, %v186
    %v188 = vxor.u32 %v187, 2147483648
    %v189 = vmul.f32 %v188, 1.442695
    %v190 = vpow.pop %v189
    %v191 = vadd.f32 %v190, 1.0
    %v192 = vrcp.pop %v191
    %v193 = vmul.f32 1.0, %v192
    %v194 = vmul.f32 %v182, %v164
    %v195 = vmul.f32 %v174, %v185
    %v196 = vadd.f32 %v194, %v195
    %v197 = vtanh.pop %v196
    %v198 = vmul.f32 %v193, %v197
    %v199 = vmul.f32 %v131, %v198
    %v200 = vadd.f32 %v71, %v199
    %v201 = vxor.u32 %v200, 2147483648
    %v202 = vmul.f32 %v201, 1.442695
    %v203 = vpow.pop %v202
    %v204 = vadd.f32 %v203, 1.0
    %v205 = vrcp.pop %v204
    %v206 = vmul.f32 1.0, %v205
    %v207 = vmul.f32 %v140, %v198
    %v208 = vadd.f32 %v89, %v207
    %v209 = vxor.u32 %v208, 2147483648
    %v210 = vmul.f32 %v209, 1.442695
    %v211 = vpow.pop %v210
    %v212 = vadd.f32 %v211, 1.0
    %v213 = vrcp.pop %v212
    %v214 = vmul.f32 1.0, %v213
    %v215 = vmul.f32 %v149, %v198
    %v216 = vadd.f32 %v107, %v215
    %v217 = vtanh.pop %v216
    %v218 = vmul.f32 %v153, %v198
    %v219 = vadd.f32 %v125, %v218
    %v220 = vxor.u32 %v219, 2147483648
    %v221 = vmul.f32 %v220, 1.442695
    %v222 = vpow.pop %v221
    %v223 = vadd.f32 %v222, 1.0
    %v224 = vrcp.pop %v223
    %v225 = vmul.f32 1.0, %v224
    %v226 = vmul.f32 %v214, %v196
    %v227 = vmul.f32 %v206, %v217
    %v228 = vadd.f32 %v226, %v227
    %v229 = vtanh.pop %v228
    %v230 = vmul.f32 %v225, %v229
    %v231 = vmul.f32 %v131, %v230
    %v232 = vadd.f32 %v72, %v231
    %v233 = vxor.u32 %v232, 2147483648
    %v234 = vmul.f32 %v233, 1.442695
    %v235 = vpow.pop %v234
    %v236 = vadd.f32 %v235, 1.0
    %v237 = vrcp.pop %v236
    %v238 = vmul.f32 1.0, %v237
    %v239 = vmul.f32 %v140, %v230
    %v240 = vadd.f32 %v90, %v239
    %v241 = vxor.u32 %v240, 2147483648
    %v242 = vmul.f32 %v241, 1.442695
    %v243 = vpow.pop %v242
    %v244 = vadd.f32 %v243, 1.0
    %v245 = vrcp.pop %v244
    %v246 = vmul.f32 1.0, %v245
    %v247 = vmul.f32 %v149, %v230
    %v248 = vadd.f32 %v108, %v247
    %v249 = vtanh.pop %v248
    %v250 = vmul.f32 %v153, %v230
    %v251 = vadd.f32 %v126, %v250
    %v252 = vxor.u32 %v251, 2147483648
    %v253 = vmul.f32 %v252, 1.442695
    %v254 = vpow.pop %v253
    %v255 = vadd.f32 %v254, 1.0
    %v256 = vrcp.pop %v255
    %v257 = vmul.f32 1.0, %v256
    %v258 = vmul.f32 %v246, %v228
    %v259 = vmul.f32 %v238, %v249
    %v260 = vadd.f32 %v258, %v259
    %v261 = vtanh.pop %v260
    %v262 = vmul.f32 %v257, %v261
    %v263 = vmul.f32 %v131, %v262
    %v264 = vadd.f32 %v73, %v263
    %v265 = vxor.u32 %v264, 2147483648
    %v266 = vmul.f32 %v265, 1.442695
    %v267 = vpow.pop %v266
    %v268 = vadd.f32 %v267, 1.0
    %v269 = vrcp.pop %v268
    %v270 = vmul.f32 1.0, %v269
    %v271 = vmul.f32 %v140, %v262
    %v272 = vadd.f32 %v91, %v271
    %v273 = vxor.u32 %v272, 2147483648
    %v274 = vmul.f32 %v273, 1.442695
    %v275 = vpow.pop %v274
    %v276 = vadd.f32 %v275, 1.0
    %v277 = vrcp.pop %v276
    %v278 = vmul.f32 1.0, %v277
    %v279 = vmul.f32 %v149, %v262
    %v280 = vadd.f32 %v109, %v279
    %v281 = vtanh.pop %v280
    %v282 = vmul.f32 %v153, %v262
    %v283 = vadd.f32 %v127, %v282
    %v284 = vxor.u32 %v283, 2147483648
    %v285 = vmul.f32 %v284, 1.442695
    %v286 = vpow.pop %v285
    %v287 = vadd.f32 %v286, 1.0
    %v288 = vrcp.pop %v287
    %v289 = vmul.f32 1.0, %v288
    %v290 = vmul.f32 %v278, %v260
    %v291 = vmul.f32 %v270, %v281
    %v292 = vadd.f32 %v290, %v291
    %v293 = vtanh.pop %v292
    %v294 = vmul.f32 %v289, %v293
    %v295 = vmul.f32 %v131, %v294
    %v296 = vadd.f32 %v74, %v295
    %v297 = vxor.u32 %v296, 2147483648
    %v298 = vmul.f32 %v297, 1.442695
    %v299 = vpow.pop %v298
    %v300 = vadd.f32 %v299, 1.0
    %v301 = vrcp.pop %v300
    %v302 = vmul.f32 1.0, %v301
    %v303 = vmul.f32 %v140, %v294
    %v304 = vadd.f32 %v92, %v303
    %v305 = vxor.u32 %v304, 2147483648
    %v306 = vmul.f32 %v305, 1.442695
    %v307 = vpow.pop %v306
    %v308 = vadd.f32 %v307, 1.0
    %v309 = vrcp.pop %v308
    %v310 = vmul.f32 1.0, %v309
    %v311 = vmul.f32 %v149, %v294
    %v312 = vadd.f32 %v110, %v311
    %v313 = vtanh.pop %v312
    %v314 = vmul.f32 %v153, %v294
    %v315 = vadd.f32 %v128, %v314
    %v316 = vxor.u32 %v315, 2147483648
    %v317 = vmul.f32 %v316, 1.442695
    %v318 = vpow.pop %v317
    %v319 = vadd.f32 %v318, 1.0
    %v320 = vrcp.pop %v319
    %v321 = vmul.f32 1.0, %v320
    %v322 = vmul.f32 %v310, %v292
    %v323 = vmul.f32 %v302, %v313
    %v324 = vadd.f32 %v322, %v323
    %v325 = vtanh.pop %v324
    %v326 = vmul.f32 %v321, %v325
    %v327 = vmul.f32 %v131, %v326
    %v328 = vadd.f32 %v75, %v327
    %v329 = vxor.u32 %v328, 2147483648
    %v330 = vmul.f32 %v329, 1.442695
    %v331 = vpow.pop %v330
    %v332 = vadd.f32 %v331, 1.0
    %v333 = vrcp.pop %v332
    %v334 = vmul.f32 1.0, %v333
    %v335 = vmul.f32 %v140, %v326
    %v336 = vadd.f32 %v93, %v335
    %v337 = vxor.u32 %v336, 2147483648
    %v338 = vmul.f32 %v337, 1.442695
    %v339 = vpow.pop %v338
    %v340 = vadd.f32 %v339, 1.0
    %v341 = vrcp.pop %v340
    %v342 = vmul.f32 1.0, %v341
    %v343 = vmul.f32 %v149, %v326
    %v344 = vadd.f32 %v111, %v343
    %v345 = vtanh.pop %v344
    %v346 = vmul.f32 %v153, %v326
    %v347 = vadd.f32 %v129, %v346
    %v348 = vxor.u32 %v347, 2147483648
    %v349 = vmul.f32 %v348, 1.442695
    %v350 = vpow.pop %v349
    %v351 = vadd.f32 %v350, 1.0
    %v352 = vrcp.pop %v351
    %v353 = vmul.f32 1.0, %v352
    %v354 = vmul.f32 %v342, %v324
    %v355 = vmul.f32 %v334, %v345
    %v356 = vadd.f32 %v354, %v355
    %v357 = vtanh.pop %v356
    %v358 = vmul.f32 %v353, %v357
    %v359 = vmul.f32 %v131, %v358
    %v360 = vadd.f32 %v76, %v359
    %v361 = vxor.u32 %v360, 2147483648
    %v362 = vmul.f32 %v361, 1.442695
    %v363 = vpow.pop %v362
    %v364 = vadd.f32 %v363, 1.0
    %v365 = vrcp.pop %v364
    %v366 = vmul.f32 1.0, %v365
    %v367 = vmul.f32 %v140, %v358
    %v368 = vadd.f32 %v94, %v367
    %v369 = vxor.u32 %v368, 2147483648
    %v370 = vmul.f32 %v369, 1.442695
    %v371 = vpow.pop %v370
    %v372 = vadd.f32 %v371, 1.0
    %v373 = vrcp.pop %v372
    %v374 = vmul.f32 1.0, %v373
    %v375 = vmul.f32 %v149, %v358
    %v376 = vadd.f32 %v112, %v375
    %v377 = vtanh.pop %v376
    %v378 = vmul.f32 %v153, %v358
    %v379 = vadd.f32 %v130, %v378
    %v380 = vxor.u32 %v379, 2147483648
    %v381 = vmul.f32 %v380, 1.442695
    %v382 = vpow.pop %v381
    %v383 = vadd.f32 %v382, 1.0
    %v384 = vrcp.pop %v383
    %v385 = vmul.f32 1.0, %v384
    %v386 = vmul.f32 %v374, %v356
    %v387 = vmul.f32 %v366, %v377
    %v388 = vadd.f32 %v386, %v387
    %v389 = vtanh.pop %v388
    %v390 = vmul.f32 %v385, %v389
    %v391 = vstv %s49
    %v392 = vmul.f32 %v390, %v391
    %v393 = vstv %s50
    %v394 = vadd.f32 %v392, %v393
    %395 = vst [vmem:[#allocation7] sm:$0xff] %v394
    // Predicated region
    $region18: #{tpu_custom_call.1} parent=1 // pred_check
      _
    $region19: #{tpu_custom_call.1} parent=1 // pred_check_branch
      %397 = sbr.rel (0) target = $region21
    $region20: #{tpu_custom_call.1} parent=1 // pred_region
      %s399 = ssub.s32 128, 128
      %400 = vsyncadd [#allocation4], %s399
      %s402 = sshll.u32 [#allocation7], 4
      %s403 = int_to_ptr.vmem [resolvable:$true] %s402
      %405 = dma.vmem_to_hbm [thread:$0]  %s403, 128, %s2, [#allocation4]
    $region21: #{tpu_custom_call.1} parent=1 // pred_fallthru
      _
    // Predicated region
    $region22: #{tpu_custom_call.1} parent=1 // pred_check
      _
    $region23: #{tpu_custom_call.1} parent=1 // pred_check_branch
      %407 = sbr.rel (0) target = $region25
    $region24: #{tpu_custom_call.1} parent=1 // pred_region
      %408 = dma.done [#allocation4], 128
    $region25: #{tpu_custom_call.1} parent=1 // pred_fallthru
      _
    %409 = vsyncpa [#allocation3], 1
    %410 = vsyncpa [#allocation4], 1
    %411 = vsyncpa [#allocation5], 1

</llo_original>
